<compile_context>
chip_gen: v6e
topology: v6e:2x2x1
jax: 0.10.0
libtpu: 0.0.40
codegen_flags: <defaults>
</compile_context>

<pallas_src>
import jax
import jax.numpy as jnp
from jax.experimental import pallas as pl
from jax.experimental.pallas import tpu as pltpu

LAMDA = 0.2      # module default lamda=0.2
EPS = 1e-12      # torch F.normalize default eps

_TM_TARGET = 512   # row tile of adj / out   (review: 512 in bf16)
_TK_TARGET = 1024  # contraction tile         (review: 1024 in bf16)
_PAD = 128         # pad N only to a multiple of 128 (finer than before)


def _round_up(x, m):
    return ((x + m - 1) // m) * m


def _pick_tile(extent, target):
    """Largest tile <= target that divides extent (extent is a multiple of 128)."""
    t = min(target, extent)
    while extent % t:
        t //= 2
    return t


# --------------------------------------------------------------------------
# Kernel 2: out = (1-l) * (A @ P) + l * P + b       (A, P_k in bf16, acc f32)
# --------------------------------------------------------------------------
def _bgcna_kernel(adj_ref, pk_ref, pi_ref, b_ref, out_ref, acc_ref):
    k = pl.program_id(1)

    @pl.when(k == 0)
    def _init():
        acc_ref[...] = jnp.zeros_like(acc_ref)

    # bf16 x bf16 -> f32 accumulate on the MXU.
    acc_ref[...] += jnp.dot(adj_ref[...], pk_ref[...],
                            preferred_element_type=jnp.float32)

    @pl.when(k == pl.num_programs(1) - 1)
    def _finalize():
        out = ((1.0 - LAMDA) * acc_ref[...]
               + LAMDA * pi_ref[...]                  # residual stays f32
               + b_ref[...])                          # bias f32
        out_ref[...] = out.astype(out_ref.dtype)


# --------------------------------------------------------------------------
# Kernel 3: F.embedding(x, table) row-gather (per-row DMA, indices in SMEM),
# double-buffered across grid steps, then F.normalize (p=2, dim=1 == L axis).
# --------------------------------------------------------------------------
def _gather_norm_kernel(idx_ref, table_hbm, out_ref, row_buf, sems):
    b = pl.program_id(0)
    nb = pl.num_programs(0)
    L = row_buf.shape[1]

    def fetch(bb, slot):
        # L is small & static: issue all row DMAs for batch `bb` into `slot`.
        for l in range(L):
            pltpu.make_async_copy(
                table_hbm.at[pl.ds(idx_ref[bb * L + l], 1), :],
                row_buf.at[slot, pl.ds(l, 1), :],
                sems.at[slot, l]).start()

    @pl.when(b == 0)
    def _prime():
        fetch(0, 0)

    slot = b % 2

    # Prefetch next batch's rows into the other slot before waiting (hides the
    # DMA latency behind this step's wait + normalize).
    @pl.when(b + 1 < nb)
    def _prefetch():
        fetch(b + 1, 1 - slot)

    for l in range(L):
        pltpu.make_async_copy(
            table_hbm.at[pl.ds(0, 1), :],        # src index irrelevant for wait
            row_buf.at[slot, pl.ds(l, 1), :],
            sems.at[slot, l]).wait()

    x = row_buf[slot].astype(jnp.float32)                 # (L, C)
    ss = jnp.sum(x * x, axis=0, keepdims=True)            # (1, C) — dim=1 of (B,L,C)
    inv = jax.lax.rsqrt(jnp.maximum(ss, EPS * EPS))       # == 1 / max(||x||, EPS)
    out_ref[...] = (x * inv)[None, ...].astype(out_ref.dtype)


# --------------------------------------------------------------------------
# Wrapper
# --------------------------------------------------------------------------
def neighbor_embedding_forward(x_idx, edge, embedding, W, b):
    """edge = (indices(2,E), values(E,), (N,N)) as in torch.sparse_coo_tensor(*edge)."""
    coo_idx, coo_val, size = edge
    N = int(size[0])
    C = W.shape[1]

    Np = _round_up(N, _PAD)
    tm = _pick_tile(Np, _TM_TARGET)
    tk = _pick_tile(Np, _TK_TARGET)

    # Glue: densify the sparse COO adjacency (duplicates summed, like coalesce),
    # scattering directly into the padded bf16 buffer (no jnp.pad copy).
    adj_bf = jnp.zeros((Np, Np), jnp.bfloat16).at[coo_idx[0], coo_idx[1]].add(
        coo_val.astype(jnp.bfloat16))

    # P = E @ W : tiny projection, left to XLA (K=32 underfills the MXU).
    emb_p = jnp.pad(embedding.astype(jnp.float32), ((0, Np - N), (0, 0)))
    P = jnp.dot(emb_p, W.astype(jnp.float32),
                precision=jax.lax.Precision.HIGHEST)        # (Np, C) f32
    P_bf = P.astype(jnp.bfloat16)                            # contraction input

    # ---- kernel 2: out = (1-l) * A @ P + l * P + b ------------------------
    grid = (Np // tm, Np // tk)
    cost = pl.CostEstimate(
        flops=2 * Np * Np * C + 3 * Np * C,
        transcendentals=0,
        bytes_accessed=(2 * Np * Np                      # adj (bf16)
                        + (Np // tm) * Np * C * 2        # P_k re-read per row tile
                        + Np * C * 4                     # P_i residual (f32)
                        + Np * C * 4                     # out (f32)
                        + 4 * C))                        # bias
    emb_out = pl.pallas_call(
        _bgcna_kernel,
        out_shape=jax.ShapeDtypeStruct((Np, C), jnp.float32),
        grid_spec=pltpu.PrefetchScalarGridSpec(
            num_scalar_prefetch=0,
            grid=grid,
            in_specs=[pl.BlockSpec((tm, tk), lambda i, k: (i, k)),   # adj tile (bf16)
                      pl.BlockSpec((tk, C), lambda i, k: (k, 0)),    # P contraction (bf16)
                      pl.BlockSpec((tm, C), lambda i, k: (i, 0)),    # P residual (f32)
                      pl.BlockSpec((1, C), lambda i, k: (0, 0))],    # bias
            out_specs=pl.BlockSpec((tm, C), lambda i, k: (i, 0)),
            scratch_shapes=[pltpu.VMEM((tm, C), jnp.float32)]),
        compiler_params=pltpu.CompilerParams(
            dimension_semantics=("parallel", "arbitrary"),
            vmem_limit_bytes=32 * 1024 * 1024),
        cost_estimate=cost,
    )(adj_bf, P_bf, P, b.reshape(1, C).astype(jnp.float32))

    # dropout: inference mode -> identity

    # ---- kernel 3: gather + L2 normalize (pipelined row DMA) ---------------
    B, L = x_idx.shape
    # clamp untrusted indices so the row DMA stays in bounds (torch would raise)
    idx_flat = jnp.clip(x_idx.reshape(-1).astype(jnp.int32), 0, N - 1)
    out = pl.pallas_call(
        _gather_norm_kernel,
        out_shape=jax.ShapeDtypeStruct((B, L, C), jnp.float32),
        grid_spec=pltpu.PrefetchScalarGridSpec(
            num_scalar_prefetch=1,                          # idx_flat -> SMEM
            grid=(B,),
            in_specs=[pl.BlockSpec(memory_space=pl.ANY)],   # table stays in HBM
            out_specs=pl.BlockSpec((1, L, C), lambda bb, idx: (bb, 0, 0)),
            scratch_shapes=[pltpu.VMEM((2, L, C), jnp.float32),   # double buffer
                            pltpu.SemaphoreType.DMA((2, L))]),
        compiler_params=pltpu.CompilerParams(
            dimension_semantics=("arbitrary",)),            # manual cross-step prefetch
    )(idx_flat, emb_out)
    return out


if __name__ == "__main__":
    # small, deterministic shapes
    N = 16            # number of nodes / rows in the embedding table
    F_IN = 32         # num_embeddings (node feature dim)
    C = 128           # out_channels
    B, L = 2, 8       # index tensor x: (B, L)
    E = 48            # number of edges in the sparse COO adjacency

    key = jax.random.PRNGKey(0)
    k_emb, k_w, k_b, k_row, k_col, k_val, k_x = jax.random.split(key, 7)

    embedding = jax.random.normal(k_emb, (N, F_IN), dtype=jnp.float32)
    W = jax.random.normal(k_w, (F_IN, C), dtype=jnp.float32) * 0.05
    b = jax.random.normal(k_b, (C,), dtype=jnp.float32) * 0.01

    rows = jax.random.randint(k_row, (E,), 0, N, dtype=jnp.int32)
    cols = jax.random.randint(k_col, (E,), 0, N, dtype=jnp.int32)
    vals = jax.random.uniform(k_val, (E,), dtype=jnp.float32)
    edge = (jnp.stack([rows, cols], axis=0), vals, (N, N))

    x_idx = jax.random.randint(k_x, (B, L), 0, N, dtype=jnp.int32)

    out = neighbor_embedding_forward(x_idx, edge, embedding, W, b)
    jax.block_until_ready(out)
    assert out.shape == (B, L, C) and out.dtype == jnp.float32

    # pure-JAX reference (same BGCNA approximation; mirrors the kernel's
    # bf16 quantization of adj / P on the A@P term with f32 accumulation)
    hi = jax.lax.Precision.HIGHEST
    adj_bf_ref = jnp.zeros((N, N), jnp.bfloat16).at[rows, cols].add(
        vals.astype(jnp.bfloat16))
    adj_ref = adj_bf_ref.astype(jnp.float32)
    P_ref = jnp.dot(embedding, W, precision=hi)                  # (N, C) f32
    P_bf_ref = P_ref.astype(jnp.bfloat16).astype(jnp.float32)
    emb_ref = ((1.0 - LAMDA) * jnp.matmul(adj_ref, P_bf_ref, precision=hi)
               + LAMDA * P_ref + b[None, :])
    g = emb_ref[x_idx]                                           # (B, L, C)
    nrm = jnp.sqrt(jnp.sum(g * g, axis=1, keepdims=True))        # F.normalize dim=1
    ref = g / jnp.maximum(nrm, EPS)
    assert jnp.allclose(out, ref, atol=2e-3, rtol=2e-3), "mismatch vs pure-JAX reference"

    print("KERNEL_OK")
</pallas_src>

<mosaic_0001>
module attributes {stable_mosaic.version = 11 : i64} {
  func.func @_bgcna_kernel(%arg0: i32, %arg1: i32, %arg2: memref<128x128xbf16, #tpu.memory_space<vmem>>, %arg3: memref<128x128xbf16, #tpu.memory_space<vmem>>, %arg4: memref<128x128xf32, #tpu.memory_space<vmem>>, %arg5: memref<1x128xf32, #tpu.memory_space<vmem>>, %arg6: memref<128x128xf32, #tpu.memory_space<vmem>>, %arg7: memref<128x128xf32, #tpu.memory_space<vmem>>) attributes {dimension_semantics = [#tpu.dimension_semantics<parallel>, #tpu.dimension_semantics<arbitrary>], iteration_bounds = array<i64: 1, 1>, scalar_prefetch = 0 : i64, scratch_operands = 1 : i64, tpu.core_type = #tpu.core_type<tc>, window_params = [{transform_indices = @transform_0, window_bounds = array<i64: 128, 128>}, {transform_indices = @transform_1, window_bounds = array<i64: 128, 128>}, {transform_indices = @transform_2, window_bounds = array<i64: 128, 128>}, {pipeline_mode = #tpu.pipeline_mode<synchronous>, transform_indices = @transform_3, window_bounds = array<i64: 1, 128>}, {transform_indices = @transform_4, window_bounds = array<i64: 128, 128>}]} {
    %c0_i32 = arith.constant 0 : i32
    %0 = arith.cmpi eq, %arg1, %c0_i32 : i32
    %1 = arith.extui %0 : i1 to i32
    %c0_i32_0 = arith.constant 0 : i32
    %2 = arith.cmpi ne, %1, %c0_i32_0 : i32
    scf.if %2 {
      %cst_10 = arith.constant 0.000000e+00 : f32
      %12 = vector.broadcast %cst_10 : f32 to vector<128x128xf32>
      %c0_11 = arith.constant 0 : index
      %c0_12 = arith.constant 0 : index
      %13 = vector.load %arg7[%c0_11, %c0_12] : memref<128x128xf32, #tpu.memory_space<vmem>>, vector<128x128xf32>
      tpu.vector_store %arg7[%c0_11, %c0_12], %12 {strides = array<i32>} : memref<128x128xf32, #tpu.memory_space<vmem>>, vector<128x128xf32>,
    } else {
    }
    %c0 = arith.constant 0 : index
    %c0_1 = arith.constant 0 : index
    %3 = vector.load %arg7[%c0, %c0_1] : memref<128x128xf32, #tpu.memory_space<vmem>>, vector<128x128xf32>
    %c0_2 = arith.constant 0 : index
    %c0_3 = arith.constant 0 : index
    %4 = vector.load %arg2[%c0_2, %c0_3] : memref<128x128xbf16, #tpu.memory_space<vmem>>, vector<128x128xbf16>
    %c0_4 = arith.constant 0 : index
    %c0_5 = arith.constant 0 : index
    %5 = vector.load %arg3[%c0_4, %c0_5] : memref<128x128xbf16, #tpu.memory_space<vmem>>, vector<128x128xbf16>
    %cst = arith.constant dense<0.000000e+00> : vector<128x128xf32>
    %6 = tpu.matmul %4, %5, %cst {dimension_numbers = #tpu.dot_dimension_numbers<[1], [0], [0], [1], [0, 0, 1, 1], [], []>} : vector<128x128xbf16>, vector<128x128xbf16>, vector<128x128xf32> -> vector<128x128xf32>
    %7 = arith.addf %3, %6 : vector<128x128xf32>
    %c0_6 = arith.constant 0 : index
    %c0_7 = arith.constant 0 : index
    %8 = vector.load %arg7[%c0_6, %c0_7] : memref<128x128xf32, #tpu.memory_space<vmem>>, vector<128x128xf32>
    tpu.vector_store %arg7[%c0_6, %c0_7], %7 {strides = array<i32>} : memref<128x128xf32, #tpu.memory_space<vmem>>, vector<128x128xf32>,
    %c0_i32_8 = arith.constant 0 : i32
    %9 = arith.cmpi eq, %arg1, %c0_i32_8 : i32
    %10 = arith.extui %9 : i1 to i32
    %c0_i32_9 = arith.constant 0 : i32
    %11 = arith.cmpi ne, %10, %c0_i32_9 : i32
    scf.if %11 {
      %c0_10 = arith.constant 0 : index
      %c0_11 = arith.constant 0 : index
      %12 = vector.load %arg7[%c0_10, %c0_11] : memref<128x128xf32, #tpu.memory_space<vmem>>, vector<128x128xf32>
      %cst_12 = arith.constant 8.000000e-01 : f32
      %13 = vector.broadcast %cst_12 : f32 to vector<128x128xf32>
      %14 = arith.mulf %13, %12 : vector<128x128xf32>
      %c0_13 = arith.constant 0 : index
      %c0_14 = arith.constant 0 : index
      %15 = vector.load %arg4[%c0_13, %c0_14] : memref<128x128xf32, #tpu.memory_space<vmem>>, vector<128x128xf32>
      %cst_15 = arith.constant 2.000000e-01 : f32
      %16 = vector.broadcast %cst_15 : f32 to vector<128x128xf32>
      %17 = arith.mulf %16, %15 : vector<128x128xf32>
      %18 = arith.addf %14, %17 : vector<128x128xf32>
      %c0_16 = arith.constant 0 : index
      %c0_17 = arith.constant 0 : index
      %19 = vector.load %arg5[%c0_16, %c0_17] : memref<1x128xf32, #tpu.memory_space<vmem>>, vector<1x128xf32>
      %20 = vector.broadcast %19 : vector<1x128xf32> to vector<128x128xf32>
      %21 = arith.addf %18, %20 : vector<128x128xf32>
      %c0_18 = arith.constant 0 : index
      %c0_19 = arith.constant 0 : index
      %22 = vector.load %arg6[%c0_18, %c0_19] : memref<128x128xf32, #tpu.memory_space<vmem>>, vector<128x128xf32>
      tpu.vector_store %arg6[%c0_18, %c0_19], %21 {strides = array<i32>} : memref<128x128xf32, #tpu.memory_space<vmem>>, vector<128x128xf32>,
    } else {
    }
    return
  }
  func.func @transform_0(%arg0: i32, %arg1: i32) -> (i32, i32) {
    %c0_i32 = arith.constant 0 : i32
    return %arg0, %arg1 : i32, i32
  }
  func.func @transform_1(%arg0: i32, %arg1: i32) -> (i32, i32) {
    %c0_i32 = arith.constant 0 : i32
    %c0_i32_0 = arith.constant 0 : i32
    return %arg1, %c0_i32 : i32, i32
  }
  func.func @transform_2(%arg0: i32, %arg1: i32) -> (i32, i32) {
    %c0_i32 = arith.constant 0 : i32
    %c0_i32_0 = arith.constant 0 : i32
    return %arg0, %c0_i32 : i32, i32
  }
  func.func @transform_3(%arg0: i32, %arg1: i32) -> (i32, i32) {
    %c0_i32 = arith.constant 0 : i32
    %c0_i32_0 = arith.constant 0 : i32
    %c0_i32_1 = arith.constant 0 : i32
    return %c0_i32, %c0_i32_0 : i32, i32
  }
  func.func @transform_4(%arg0: i32, %arg1: i32) -> (i32, i32) {
    %c0_i32 = arith.constant 0 : i32
    %c0_i32_0 = arith.constant 0 : i32
    return %arg0, %c0_i32 : i32, i32
  }
}

</mosaic_0001>

<llo_original>
// kernel: tpu_custom_call.1
$region0: #{tpu_custom_call.1}
  #allocation0 [shape = 'u32[]', space=smem, size = 0x4, offset = 0x4, fixed_abs, tag = 'smem constant byte address 0x4 - core index']
  #allocation1 [shape = 'u32[144,128]{1,0:T(1,128)}', space=vmem, size = 0x12000, scoped, tag = 'internal scratch']
  #allocation2 [shape = 'f32[128,128]{1,0:T(8,128)}', space=vmem, size = 0x10000, scoped, tag = 'scratch operand']
  %s0 = inlined_call_operand.hbm [shape: bf16[128,128], index: 0, kind: input, shape index: {}]
  %s1 = inlined_call_operand.hbm [shape: bf16[128,128], index: 1, kind: input, shape index: {}]
  %s2 = inlined_call_operand.hbm [shape: f32[128,128], index: 2, kind: input, shape index: {}]
  %s3 = inlined_call_operand.vmem [shape: f32[1,128], index: 3, kind: input, shape index: {}]
  %s4 = inlined_call_operand.hbm [shape: f32[128,128], index: 4, kind: output, shape index: {}]
  %s5 = sld [smem:[#allocation0]]
  $region46: #{tpu_custom_call.1} parent=0
    _
  %s7 = ssub.s32 1, %s5
  %s8 = scalar_select 0, %s7, %s5
  $region1: #{tpu_custom_call.1} parent=0
    #allocation3 [shape = 'u8[32768]{0}', space=vmem, size = 0x8000, scoped, tag = 'input window, operand 0, single buffered']
    #allocation4 [shape = 's32[1]{0}', space=sflag, size = 0x4, scoped, tag = 'scoped memory for tpu_custom_call.1']
    #allocation5 [shape = 's32[1]{0}', space=sflag, size = 0x4, scoped, tag = 'scoped memory for tpu_custom_call.1']
    #allocation6 [shape = 'u8[32768]{0}', space=vmem, size = 0x8000, scoped, tag = 'input window, operand 1, single buffered']
    #allocation7 [shape = 's32[1]{0}', space=sflag, size = 0x4, scoped, tag = 'scoped memory for tpu_custom_call.1']
    #allocation8 [shape = 'u8[65536]{0}', space=vmem, size = 0x10000, scoped, tag = 'input window, operand 2, single buffered']
    #allocation9 [shape = 'u8[65536]{0}', space=vmem, size = 0x10000, scoped, tag = 'output window, operand 0, single buffered']
    %9 = vsyncpa [#allocation4], 0
    %10 = vsyncpa [#allocation7], 0
    %11 = vsyncpa [#allocation5], 0
    // Predicated region
    $region2: #{tpu_custom_call.1} parent=1 // pred_check
      _
    $region3: #{tpu_custom_call.1} parent=1 // pred_check_branch
      %13 = sbr.rel (0) target = $region5
    $region4: #{tpu_custom_call.1} parent=1 // pred_region
      %s15 = ssub.s32 1024, 1024
      %16 = vsyncadd [#allocation4], %s15
      %s17 = sshll.u32 [#allocation3], 4
      %s18 = int_to_ptr.vmem [resolvable:$true] %s17
      %23 = dma.hbm_to_vmem [thread:$0]  %s0, 1024, %s18, [#allocation4], 64, 64, 4
    $region5: #{tpu_custom_call.1} parent=1 // pred_fallthru
      _
    // Predicated region
    $region6: #{tpu_custom_call.1} parent=1 // pred_check
      _
    $region7: #{tpu_custom_call.1} parent=1 // pred_check_branch
      %25 = sbr.rel (0) target = $region9
    $region8: #{tpu_custom_call.1} parent=1 // pred_region
      %s27 = ssub.s32 1024, 1024
      %28 = vsyncadd [#allocation7], %s27
      %s29 = sshll.u32 [#allocation6], 4
      %s30 = int_to_ptr.vmem [resolvable:$true] %s29
      %35 = dma.hbm_to_vmem [thread:$0]  %s1, 1024, %s30, [#allocation7], 64, 64, 4
    $region9: #{tpu_custom_call.1} parent=1 // pred_fallthru
      _
    // Predicated region
    $region10: #{tpu_custom_call.1} parent=1 // pred_check
      _
    $region11: #{tpu_custom_call.1} parent=1 // pred_check_branch
      %37 = sbr.rel (0) target = $region13
    $region12: #{tpu_custom_call.1} parent=1 // pred_region
      %s39 = ssub.s32 2048, 2048
      %40 = vsyncadd [#allocation7], %s39
      %s41 = sshll.u32 [#allocation8], 4
      %s42 = int_to_ptr.vmem [resolvable:$true] %s41
      %47 = dma.hbm_to_vmem [thread:$0]  %s2, 2048, %s42, [#allocation7], 128, 128, 8
    $region13: #{tpu_custom_call.1} parent=1 // pred_fallthru
      _
    // Predicated region
    $region14: #{tpu_custom_call.1} parent=1 // pred_check
      _
    $region15: #{tpu_custom_call.1} parent=1 // pred_check_branch
      %49 = sbr.rel (0) target = $region17
    $region16: #{tpu_custom_call.1} parent=1 // pred_region
      _
    $region17: #{tpu_custom_call.1} parent=1 // pred_fallthru
      _
    // Predicated region
    $region18: #{tpu_custom_call.1} parent=1 // pred_check
      _
    $region19: #{tpu_custom_call.1} parent=1 // pred_check_branch
      %51 = sbr.rel (0) target = $region21
    $region20: #{tpu_custom_call.1} parent=1 // pred_region
      %52 = dma.done [#allocation4], 1024
    $region21: #{tpu_custom_call.1} parent=1 // pred_fallthru
      _
    // Predicated region
    $region22: #{tpu_custom_call.1} parent=1 // pred_check
      _
    $region23: #{tpu_custom_call.1} parent=1 // pred_check_branch
      %54 = sbr.rel (0) target = $region25
    $region24: #{tpu_custom_call.1} parent=1 // pred_region
      %55 = dma.done [#allocation7], 1024
    $region25: #{tpu_custom_call.1} parent=1 // pred_fallthru
      _
    // Predicated region
    $region26: #{tpu_custom_call.1} parent=1 // pred_check
      _
    $region27: #{tpu_custom_call.1} parent=1 // pred_check_branch
      %57 = sbr.rel (0) target = $region29
    $region28: #{tpu_custom_call.1} parent=1 // pred_region
      %58 = dma.done [#allocation7], 2048
    $region29: #{tpu_custom_call.1} parent=1 // pred_fallthru
      _
    %p60 = scmp.eq.s32.totalorder 0, 0
    // Predicated region
    $region30: #{tpu_custom_call.1} parent=1 // pred_check
      %p61 = pneg %p60
    $region31: #{tpu_custom_call.1} parent=1 // pred_check_branch
      %63 = sbr.rel (%p61) target = $region33
    $region32: #{tpu_custom_call.1} parent=1 // pred_region
      %64 = vst [vmem:[#allocation2] sm:$0xff] 0.0
      %65 = vst [vmem:[#allocation2 + $0x8] sm:$0xff] 0.0
      %66 = vst [vmem:[#allocation2 + $0x10] sm:$0xff] 0.0
      %67 = vst [vmem:[#allocation2 + $0x18] sm:$0xff] 0.0
      %68 = vst [vmem:[#allocation2 + $0x20] sm:$0xff] 0.0
      %69 = vst [vmem:[#allocation2 + $0x28] sm:$0xff] 0.0
      %70 = vst [vmem:[#allocation2 + $0x30] sm:$0xff] 0.0
      %71 = vst [vmem:[#allocation2 + $0x38] sm:$0xff] 0.0
      %72 = vst [vmem:[#allocation2 + $0x40] sm:$0xff] 0.0
      %73 = vst [vmem:[#allocation2 + $0x48] sm:$0xff] 0.0
      %74 = vst [vmem:[#allocation2 + $0x50] sm:$0xff] 0.0
      %75 = vst [vmem:[#allocation2 + $0x58] sm:$0xff] 0.0
      %76 = vst [vmem:[#allocation2 + $0x60] sm:$0xff] 0.0
      %77 = vst [vmem:[#allocation2 + $0x68] sm:$0xff] 0.0
      %78 = vst [vmem:[#allocation2 + $0x70] sm:$0xff] 0.0
      %79 = vst [vmem:[#allocation2 + $0x78] sm:$0xff] 0.0
    $region33: #{tpu_custom_call.1} parent=1 // pred_fallthru
      _
    %v80 = vld [vmem:[#allocation2] sm:$0xff]
    %v81 = vld [vmem:[#allocation2 + $0x8] sm:$0xff]
    %v82 = vld [vmem:[#allocation2 + $0x10] sm:$0xff]
    %v83 = vld [vmem:[#allocation2 + $0x18] sm:$0xff]
    %v84 = vld [vmem:[#allocation2 + $0x20] sm:$0xff]
    %v85 = vld [vmem:[#allocation2 + $0x28] sm:$0xff]
    %v86 = vld [vmem:[#allocation2 + $0x30] sm:$0xff]
    %v87 = vld [vmem:[#allocation2 + $0x38] sm:$0xff]
    %v88 = vld [vmem:[#allocation2 + $0x40] sm:$0xff]
    %v89 = vld [vmem:[#allocation2 + $0x48] sm:$0xff]
    %v90 = vld [vmem:[#allocation2 + $0x50] sm:$0xff]
    %v91 = vld [vmem:[#allocation2 + $0x58] sm:$0xff]
    %v92 = vld [vmem:[#allocation2 + $0x60] sm:$0xff]
    %v93 = vld [vmem:[#allocation2 + $0x68] sm:$0xff]
    %v94 = vld [vmem:[#allocation2 + $0x70] sm:$0xff]
    %v95 = vld [vmem:[#allocation2 + $0x78] sm:$0xff]
    %v96 = vld [vmem:[#allocation3] sm:$0xf]
    %v97 = vld [vmem:[#allocation3 + $0x4] sm:$0xf]
    %v98 = vld [vmem:[#allocation3 + $0x8] sm:$0xf]
    %v99 = vld [vmem:[#allocation3 + $0xc] sm:$0xf]
    %v100 = vld [vmem:[#allocation3 + $0x10] sm:$0xf]
    %v101 = vld [vmem:[#allocation3 + $0x14] sm:$0xf]
    %v102 = vld [vmem:[#allocation3 + $0x18] sm:$0xf]
    %v103 = vld [vmem:[#allocation3 + $0x1c] sm:$0xf]
    %v104 = vld [vmem:[#allocation3 + $0x20] sm:$0xf]
    %v105 = vld [vmem:[#allocation3 + $0x24] sm:$0xf]
    %v106 = vld [vmem:[#allocation3 + $0x28] sm:$0xf]
    %v107 = vld [vmem:[#allocation3 + $0x2c] sm:$0xf]
    %v108 = vld [vmem:[#allocation3 + $0x30] sm:$0xf]
    %v109 = vld [vmem:[#allocation3 + $0x34] sm:$0xf]
    %v110 = vld [vmem:[#allocation3 + $0x38] sm:$0xf]
    %v111 = vld [vmem:[#allocation3 + $0x3c] sm:$0xf]
    %v112 = vld [vmem:[#allocation6] sm:$0xf]
    %v113 = vld [vmem:[#allocation6 + $0x4] sm:$0xf]
    %v114 = vld [vmem:[#allocation6 + $0x8] sm:$0xf]
    %v115 = vld [vmem:[#allocation6 + $0xc] sm:$0xf]
    %v116 = vld [vmem:[#allocation6 + $0x10] sm:$0xf]
    %v117 = vld [vmem:[#allocation6 + $0x14] sm:$0xf]
    %v118 = vld [vmem:[#allocation6 + $0x18] sm:$0xf]
    %v119 = vld [vmem:[#allocation6 + $0x1c] sm:$0xf]
    %v120 = vld [vmem:[#allocation6 + $0x20] sm:$0xf]
    %v121 = vld [vmem:[#allocation6 + $0x24] sm:$0xf]
    %v122 = vld [vmem:[#allocation6 + $0x28] sm:$0xf]
    %v123 = vld [vmem:[#allocation6 + $0x2c] sm:$0xf]
    %v124 = vld [vmem:[#allocation6 + $0x30] sm:$0xf]
    %v125 = vld [vmem:[#allocation6 + $0x34] sm:$0xf]
    %v126 = vld [vmem:[#allocation6 + $0x38] sm:$0xf]
    %v127 = vld [vmem:[#allocation6 + $0x3c] sm:$0xf]
    %v144 = vunpack.c.l.b16 %v96
    %v145 = vunpack.c.l.b16 %v97
    %v146 = vunpack.c.l.b16 %v98
    %v147 = vunpack.c.l.b16 %v99
    %v148 = vunpack.c.l.b16 %v100
    %v149 = vunpack.c.l.b16 %v101
    %v150 = vunpack.c.l.b16 %v102
    %v151 = vunpack.c.l.b16 %v103
    %v152 = vunpack.c.l.b16 %v104
    %v153 = vunpack.c.l.b16 %v105
    %v154 = vunpack.c.l.b16 %v106
    %v155 = vunpack.c.l.b16 %v107
    %v156 = vunpack.c.l.b16 %v108
    %v157 = vunpack.c.l.b16 %v109
    %v158 = vunpack.c.l.b16 %v110
    %v159 = vunpack.c.l.b16 %v111
    %v160 = vpack.c.b16 %v145, %v144
    %v161 = vpack.c.b16 %v147, %v146
    %v162 = vpack.c.b16 %v149, %v148
    %v163 = vpack.c.b16 %v151, %v150
    %v164 = vpack.c.b16 %v153, %v152
    %v165 = vpack.c.b16 %v155, %v154
    %v166 = vpack.c.b16 %v157, %v156
    %v167 = vpack.c.b16 %v159, %v158
    %v192 = vunpack.c.l.b16 %v112
    %v193 = vunpack.c.l.b16 %v113
    %v194 = vunpack.c.l.b16 %v114
    %v195 = vunpack.c.l.b16 %v115
    %v196 = vunpack.c.l.b16 %v116
    %v197 = vunpack.c.l.b16 %v117
    %v198 = vunpack.c.l.b16 %v118
    %v199 = vunpack.c.l.b16 %v119
    %v200 = vunpack.c.l.b16 %v120
    %v201 = vunpack.c.l.b16 %v121
    %v202 = vunpack.c.l.b16 %v122
    %v203 = vunpack.c.l.b16 %v123
    %v204 = vunpack.c.l.b16 %v124
    %v205 = vunpack.c.l.b16 %v125
    %v206 = vunpack.c.l.b16 %v126
    %v207 = vunpack.c.l.b16 %v127
    %v208 = vpack.c.b16 %v193, %v192
    %v209 = vpack.c.b16 %v195, %v194
    %v210 = vpack.c.b16 %v197, %v196
    %v211 = vpack.c.b16 %v199, %v198
    %v212 = vpack.c.b16 %v201, %v200
    %v213 = vpack.c.b16 %v203, %v202
    %v214 = vpack.c.b16 %v205, %v204
    %v215 = vpack.c.b16 %v207, %v206
    %224 = vmatprep.subr.bf16.mxu0 0
    %225 = vmatpush1.bf16.msra.mxu0 %v215
    %226 = vmatprep.subr.bf16.mxu0 0
    %227 = vmatpush1.bf16.msra.mxu0 %v214
    %228 = vmatprep.subr.bf16.mxu0 0
    %229 = vmatpush1.bf16.msra.mxu0 %v213
    %230 = vmatprep.subr.bf16.mxu0 0
    %231 = vmatpush1.bf16.msra.mxu0 %v212
    %232 = vmatprep.subr.bf16.mxu0 0
    %233 = vmatpush1.bf16.msra.mxu0 %v211
    %234 = vmatprep.subr.bf16.mxu0 0
    %235 = vmatpush1.bf16.msra.mxu0 %v210
    %236 = vmatprep.subr.bf16.mxu0 0
    %237 = vmatpush1.bf16.msra.mxu0 %v209
    %238 = vmatprep.subr.bf16.mxu0 0
    %239 = vmatpush1.bf16.msra.mxu0 %v208
    %240 = vmatprep.subr.bf16.mxu0 0
    %241 = vmatpush2.bf16.msra.mxu0 0
    %242 = vmatprep.subr.bf16.mxu0 0
    %243 = vmatpush2.bf16.msra.mxu0 0
    %244 = vmatprep.subr.bf16.mxu0 0
    %245 = vmatpush2.bf16.msra.mxu0 0
    %246 = vmatprep.subr.bf16.mxu0 0
    %247 = vmatpush2.bf16.msra.mxu0 0
    %248 = vmatprep.subr.bf16.mxu0 0
    %249 = vmatpush2.bf16.msra.mxu0 0
    %250 = vmatprep.subr.bf16.mxu0 0
    %251 = vmatpush2.bf16.msra.mxu0 0
    %252 = vmatprep.subr.bf16.mxu0 0
    %253 = vmatpush2.bf16.msra.mxu0 0
    %254 = vmatprep.subr.bf16.mxu0 0
    %255 = vmatpush2.bf16.msra.mxu0 0
    %256 = vmatprep.mubr.bf16.mxu0 0
    %257 = vmatmul.mubr.bf16.gmra.mxu0 %v160
    %v258 = vpop.f32.mrf.mxu0
    %v259 = vadd.f32 0.0, %v258
    %v260 = vpop.f32.mrf.mxu0
    %v261 = vpop.f32.mrf.mxu0
    %v262 = vadd.f32 0.0, %v261
    %v263 = vpop.f32.mrf.mxu0
    %264 = vmatprep.mubr.bf16.mxu0 0
    %265 = vmatmul.mubr.bf16.gmra.mxu0 %v161
    %v266 = vpop.f32.mrf.mxu0
    %v267 = vadd.f32 0.0, %v266
    %v268 = vpop.f32.mrf.mxu0
    %v269 = vpop.f32.mrf.mxu0
    %v270 = vadd.f32 0.0, %v269
    %v271 = vpop.f32.mrf.mxu0
    %272 = vmatprep.mubr.bf16.mxu0 0
    %273 = vmatmul.mubr.bf16.gmra.mxu0 %v162
    %v274 = vpop.f32.mrf.mxu0
    %v275 = vadd.f32 0.0, %v274
    %v276 = vpop.f32.mrf.mxu0
    %v277 = vpop.f32.mrf.mxu0
    %v278 = vadd.f32 0.0, %v277
    %v279 = vpop.f32.mrf.mxu0
    %280 = vmatprep.mubr.bf16.mxu0 0
    %281 = vmatmul.mubr.bf16.gmra.mxu0 %v163
    %v282 = vpop.f32.mrf.mxu0
    %v283 = vadd.f32 0.0, %v282
    %v284 = vpop.f32.mrf.mxu0
    %v285 = vpop.f32.mrf.mxu0
    %v286 = vadd.f32 0.0, %v285
    %v287 = vpop.f32.mrf.mxu0
    %288 = vmatprep.mubr.bf16.mxu0 0
    %289 = vmatmul.mubr.bf16.gmra.mxu0 %v164
    %v290 = vpop.f32.mrf.mxu0
    %v291 = vadd.f32 0.0, %v290
    %v292 = vpop.f32.mrf.mxu0
    %v293 = vpop.f32.mrf.mxu0
    %v294 = vadd.f32 0.0, %v293
    %v295 = vpop.f32.mrf.mxu0
    %296 = vmatprep.mubr.bf16.mxu0 0
    %297 = vmatmul.mubr.bf16.gmra.mxu0 %v165
    %v298 = vpop.f32.mrf.mxu0
    %v299 = vadd.f32 0.0, %v298
    %v300 = vpop.f32.mrf.mxu0
    %v301 = vpop.f32.mrf.mxu0
    %v302 = vadd.f32 0.0, %v301
    %v303 = vpop.f32.mrf.mxu0
    %304 = vmatprep.mubr.bf16.mxu0 0
    %305 = vmatmul.mubr.bf16.gmra.mxu0 %v166
    %v306 = vpop.f32.mrf.mxu0
    %v307 = vadd.f32 0.0, %v306
    %v308 = vpop.f32.mrf.mxu0
    %v309 = vpop.f32.mrf.mxu0
    %v310 = vadd.f32 0.0, %v309
    %v311 = vpop.f32.mrf.mxu0
    %312 = vmatprep.mubr.bf16.mxu0 0
    %313 = vmatmul.mubr.bf16.gmra.mxu0 %v167
    %v314 = vpop.f32.mrf.mxu0
    %v315 = vadd.f32 0.0, %v314
    %v316 = vpop.f32.mrf.mxu0
    %v317 = vpop.f32.mrf.mxu0
    %v318 = vadd.f32 0.0, %v317
    %v319 = vpop.f32.mrf.mxu0
    %320 = vdwg.mxu0
    %v321 = vadd.f32 %v80, %v259
    %v322 = vadd.f32 %v81, %v262
    %v323 = vadd.f32 %v82, %v267
    %v324 = vadd.f32 %v83, %v270
    %v325 = vadd.f32 %v84, %v275
    %v326 = vadd.f32 %v85, %v278
    %v327 = vadd.f32 %v86, %v283
    %v328 = vadd.f32 %v87, %v286
    %v329 = vadd.f32 %v88, %v291
    %v330 = vadd.f32 %v89, %v294
    %v331 = vadd.f32 %v90, %v299
    %v332 = vadd.f32 %v91, %v302
    %v333 = vadd.f32 %v92, %v307
    %v334 = vadd.f32 %v93, %v310
    %v335 = vadd.f32 %v94, %v315
    %v336 = vadd.f32 %v95, %v318
    %337 = vst [vmem:[#allocation2] sm:$0xff] %v321
    %338 = vst [vmem:[#allocation2 + $0x8] sm:$0xff] %v322
    %339 = vst [vmem:[#allocation2 + $0x10] sm:$0xff] %v323
    %340 = vst [vmem:[#allocation2 + $0x18] sm:$0xff] %v324
    %341 = vst [vmem:[#allocation2 + $0x20] sm:$0xff] %v325
    %342 = vst [vmem:[#allocation2 + $0x28] sm:$0xff] %v326
    %343 = vst [vmem:[#allocation2 + $0x30] sm:$0xff] %v327
    %344 = vst [vmem:[#allocation2 + $0x38] sm:$0xff] %v328
    %345 = vst [vmem:[#allocation2 + $0x40] sm:$0xff] %v329
    %346 = vst [vmem:[#allocation2 + $0x48] sm:$0xff] %v330
    %347 = vst [vmem:[#allocation2 + $0x50] sm:$0xff] %v331
    %348 = vst [vmem:[#allocation2 + $0x58] sm:$0xff] %v332
    %349 = vst [vmem:[#allocation2 + $0x60] sm:$0xff] %v333
    %350 = vst [vmem:[#allocation2 + $0x68] sm:$0xff] %v334
    %351 = vst [vmem:[#allocation2 + $0x70] sm:$0xff] %v335
    %352 = vst [vmem:[#allocation2 + $0x78] sm:$0xff] %v336
    // Predicated region
    $region34: #{tpu_custom_call.1} parent=1 // pred_check
      %p353 = pneg %p60
    $region35: #{tpu_custom_call.1} parent=1 // pred_check_branch
      %355 = sbr.rel (%p353) target = $region37
    $region36: #{tpu_custom_call.1} parent=1 // pred_region
      %v356 = vld [vmem:[#allocation2] sm:$0xff]
      %v357 = vld [vmem:[#allocation2 + $0x8] sm:$0xff]
      %v358 = vld [vmem:[#allocation2 + $0x10] sm:$0xff]
      %v359 = vld [vmem:[#allocation2 + $0x18] sm:$0xff]
      %v360 = vld [vmem:[#allocation2 + $0x20] sm:$0xff]
      %v361 = vld [vmem:[#allocation2 + $0x28] sm:$0xff]
      %v362 = vld [vmem:[#allocation2 + $0x30] sm:$0xff]
      %v363 = vld [vmem:[#allocation2 + $0x38] sm:$0xff]
      %v364 = vld [vmem:[#allocation2 + $0x40] sm:$0xff]
      %v365 = vld [vmem:[#allocation2 + $0x48] sm:$0xff]
      %v366 = vld [vmem:[#allocation2 + $0x50] sm:$0xff]
      %v367 = vld [vmem:[#allocation2 + $0x58] sm:$0xff]
      %v368 = vld [vmem:[#allocation2 + $0x60] sm:$0xff]
      %v369 = vld [vmem:[#allocation2 + $0x68] sm:$0xff]
      %v370 = vld [vmem:[#allocation2 + $0x70] sm:$0xff]
      %v371 = vld [vmem:[#allocation2 + $0x78] sm:$0xff]
      %v372 = vmul.f32 %v356, 0.8
      %v373 = vmul.f32 %v357, 0.8
      %v374 = vmul.f32 %v358, 0.8
      %v375 = vmul.f32 %v359, 0.8
      %v376 = vmul.f32 %v360, 0.8
      %v377 = vmul.f32 %v361, 0.8
      %v378 = vmul.f32 %v362, 0.8
      %v379 = vmul.f32 %v363, 0.8
      %v380 = vmul.f32 %v364, 0.8
      %v381 = vmul.f32 %v365, 0.8
      %v382 = vmul.f32 %v366, 0.8
      %v383 = vmul.f32 %v367, 0.8
      %v384 = vmul.f32 %v368, 0.8
      %v385 = vmul.f32 %v369, 0.8
      %v386 = vmul.f32 %v370, 0.8
      %v387 = vmul.f32 %v371, 0.8
      %v388 = vld [vmem:[#allocation8] sm:$0xff]
      %v389 = vld [vmem:[#allocation8 + $0x8] sm:$0xff]
      %v390 = vld [vmem:[#allocation8 + $0x10] sm:$0xff]
      %v391 = vld [vmem:[#allocation8 + $0x18] sm:$0xff]
      %v392 = vld [vmem:[#allocation8 + $0x20] sm:$0xff]
      %v393 = vld [vmem:[#allocation8 + $0x28] sm:$0xff]
      %v394 = vld [vmem:[#allocation8 + $0x30] sm:$0xff]
      %v395 = vld [vmem:[#allocation8 + $0x38] sm:$0xff]
      %v396 = vld [vmem:[#allocation8 + $0x40] sm:$0xff]
      %v397 = vld [vmem:[#allocation8 + $0x48] sm:$0xff]
      %v398 = vld [vmem:[#allocation8 + $0x50] sm:$0xff]
      %v399 = vld [vmem:[#allocation8 + $0x58] sm:$0xff]
      %v400 = vld [vmem:[#allocation8 + $0x60] sm:$0xff]
      %v401 = vld [vmem:[#allocation8 + $0x68] sm:$0xff]
      %v402 = vld [vmem:[#allocation8 + $0x70] sm:$0xff]
      %v403 = vld [vmem:[#allocation8 + $0x78] sm:$0xff]
      %v404 = vmul.f32 %v388, 0.2
      %v405 = vmul.f32 %v389, 0.2
      %v406 = vmul.f32 %v390, 0.2
      %v407 = vmul.f32 %v391, 0.2
      %v408 = vmul.f32 %v392, 0.2
      %v409 = vmul.f32 %v393, 0.2
      %v410 = vmul.f32 %v394, 0.2
      %v411 = vmul.f32 %v395, 0.2
      %v412 = vmul.f32 %v396, 0.2
      %v413 = vmul.f32 %v397, 0.2
      %v414 = vmul.f32 %v398, 0.2
      %v415 = vmul.f32 %v399, 0.2
      %v416 = vmul.f32 %v400, 0.2
      %v417 = vmul.f32 %v401, 0.2
      %v418 = vmul.f32 %v402, 0.2
      %v419 = vmul.f32 %v403, 0.2
      %v420 = vadd.f32 %v372, %v404
      %v421 = vadd.f32 %v373, %v405
      %v422 = vadd.f32 %v374, %v406
      %v423 = vadd.f32 %v375, %v407
      %v424 = vadd.f32 %v376, %v408
      %v425 = vadd.f32 %v377, %v409
      %v426 = vadd.f32 %v378, %v410
      %v427 = vadd.f32 %v379, %v411
      %v428 = vadd.f32 %v380, %v412
      %v429 = vadd.f32 %v381, %v413
      %v430 = vadd.f32 %v382, %v414
      %v431 = vadd.f32 %v383, %v415
      %v432 = vadd.f32 %v384, %v416
      %v433 = vadd.f32 %v385, %v417
      %v434 = vadd.f32 %v386, %v418
      %v435 = vadd.f32 %v387, %v419
      %v436 = vld [vmem:[%s3] sm:$0x1]
      %v438 = vlaneseq
      %v439 = vshrl.u32 %v438, 7
      %v440 = vsub.s32 0, %v439
      %v441 = vrot.slane %v436, %v440
      %v443 = vadd.f32 %v420, %v441
      %v444 = vadd.f32 %v421, %v441
      %v445 = vadd.f32 %v422, %v441
      %v446 = vadd.f32 %v423, %v441
      %v447 = vadd.f32 %v424, %v441
      %v448 = vadd.f32 %v425, %v441
      %v449 = vadd.f32 %v426, %v441
      %v450 = vadd.f32 %v427, %v441
      %v451 = vadd.f32 %v428, %v441
      %v452 = vadd.f32 %v429, %v441
      %v453 = vadd.f32 %v430, %v441
      %v454 = vadd.f32 %v431, %v441
      %v455 = vadd.f32 %v432, %v441
      %v456 = vadd.f32 %v433, %v441
      %v457 = vadd.f32 %v434, %v441
      %v458 = vadd.f32 %v435, %v441
      %459 = vst [vmem:[#allocation9] sm:$0xff] %v443
      %460 = vst [vmem:[#allocation9 + $0x8] sm:$0xff] %v444
      %461 = vst [vmem:[#allocation9 + $0x10] sm:$0xff] %v445
      %462 = vst [vmem:[#allocation9 + $0x18] sm:$0xff] %v446
      %463 = vst [vmem:[#allocation9 + $0x20] sm:$0xff] %v447
      %464 = vst [vmem:[#allocation9 + $0x28] sm:$0xff] %v448
      %465 = vst [vmem:[#allocation9 + $0x30] sm:$0xff] %v449
      %466 = vst [vmem:[#allocation9 + $0x38] sm:$0xff] %v450
      %467 = vst [vmem:[#allocation9 + $0x40] sm:$0xff] %v451
      %468 = vst [vmem:[#allocation9 + $0x48] sm:$0xff] %v452
      %469 = vst [vmem:[#allocation9 + $0x50] sm:$0xff] %v453
      %470 = vst [vmem:[#allocation9 + $0x58] sm:$0xff] %v454
      %471 = vst [vmem:[#allocation9 + $0x60] sm:$0xff] %v455
      %472 = vst [vmem:[#allocation9 + $0x68] sm:$0xff] %v456
      %473 = vst [vmem:[#allocation9 + $0x70] sm:$0xff] %v457
      %474 = vst [vmem:[#allocation9 + $0x78] sm:$0xff] %v458
    $region37: #{tpu_custom_call.1} parent=1 // pred_fallthru
      _
    // Predicated region
    $region38: #{tpu_custom_call.1} parent=1 // pred_check
      _
    $region39: #{tpu_custom_call.1} parent=1 // pred_check_branch
      %476 = sbr.rel (0) target = $region41
    $region40: #{tpu_custom_call.1} parent=1 // pred_region
      %s478 = ssub.s32 2048, 2048
      %479 = vsyncadd [#allocation5], %s478
      %s480 = sshll.u32 [#allocation9], 4
      %s481 = int_to_ptr.vmem [resolvable:$true] %s480
      %486 = dma.vmem_to_hbm [thread:$0]  %s481, 2048, %s4, [#allocation5], 128, 128, 8
    $region41: #{tpu_custom_call.1} parent=1 // pred_fallthru
      _
    // Predicated region
    $region42: #{tpu_custom_call.1} parent=1 // pred_check
      _
    $region43: #{tpu_custom_call.1} parent=1 // pred_check_branch
      %488 = sbr.rel (0) target = $region45
    $region44: #{tpu_custom_call.1} parent=1 // pred_region
      %489 = dma.done [#allocation5], 2048
    $region45: #{tpu_custom_call.1} parent=1 // pred_fallthru
      _
    %490 = vsyncpa [#allocation4], 1
    %491 = vsyncpa [#allocation7], 1
    %492 = vsyncpa [#allocation5], 1

</llo_original>
